<compile_context>
chip_gen: v6e
topology: v6e:2x2x1
jax: 0.10.0
libtpu: 0.0.40
codegen_flags: <defaults>
</compile_context>

<pallas_src>
import functools

import jax
import jax.numpy as jnp
from jax.experimental import pallas as pl
from jax.experimental.pallas import tpu as pltpu

MAX_TILE_B = 512        # rows per grid step for large batches (sweep 512/1024)
_SUBLANE = 16           # tile_b granularity: covers f32 (8) and bf16 (16) sublanes


def _qnet_kernel(x_ref, w1_ref, b1_ref, w2_ref, b2_ref, w3_ref, b3_ref, o_ref):
    # x arrives f32 from HBM; cast to bf16 in-kernel (VPU, hidden under DMA).
    x = x_ref[...].astype(jnp.bfloat16)                               # (tile_b, obs)

    # Layer 1: Linear(obs, 128) + ReLU   (bf16 x bf16 -> f32 acc, f32 epilogue)
    h1 = jnp.dot(x, w1_ref[...], preferred_element_type=jnp.float32)
    h1 = jnp.maximum(h1 + b1_ref[...], 0.0)

    # Layer 2: Linear(128, 128) + ReLU
    h2 = jnp.dot(h1.astype(jnp.bfloat16), w2_ref[...],
                 preferred_element_type=jnp.float32)
    h2 = jnp.maximum(h2 + b2_ref[...], 0.0)

    # Layer 3: Linear(128, A)  (no activation; narrow, unpadded bf16 store)
    q = jnp.dot(h2.astype(jnp.bfloat16), w3_ref[...],
                preferred_element_type=jnp.float32)
    o_ref[...] = (q + b3_ref[...]).astype(o_ref.dtype)


def _round_up(x, m):
    return ((x + m - 1) // m) * m


@functools.partial(jax.jit, static_argnames=("max_tile_b",))
def qnetwork_forward(state, params, *, max_tile_b=MAX_TILE_B):
    """state: [B, obs_dim] float32; params: w1,b1,w2,b2,w3,b3 (weights [in,out])."""
    w1, b1 = params["w1"], params["b1"]
    w2, b2 = params["w2"], params["b2"]
    w3, b3 = params["w3"], params["b3"]

    B, obs_dim = state.shape
    hidden = w1.shape[1]
    num_actions = w3.shape[1]

    # --- adaptive batch tile (static shapes under jit -> plain Python ints) ---
    tile_b = max(_SUBLANE, min(max_tile_b, _round_up(B, _SUBLANE)))
    padded_B = _round_up(B, tile_b)

    # Pad the batch (f32, only if needed) so the grid divides evenly; no dtype
    # cast / lane padding of x in the wrapper.
    x = state if padded_B == B else jnp.pad(state, ((0, padded_B - B), (0, 0)))

    # Weights are tiny and read once per call: one-time bf16 cast in the wrapper.
    w1b = w1.astype(jnp.bfloat16)
    w2b = w2.astype(jnp.bfloat16)
    w3b = w3.astype(jnp.bfloat16)
    b1f = b1.reshape(1, hidden).astype(jnp.float32)
    b2f = b2.reshape(1, hidden).astype(jnp.float32)
    b3f = b3.reshape(1, num_actions).astype(jnp.float32)

    grid = (pl.cdiv(padded_B, tile_b),)

    # weights / biases: constant index_map -> DMA'd once, resident across the grid
    pinned = lambda shape: pl.BlockSpec(shape, lambda i: (0,) * len(shape))

    out = pl.pallas_call(
        _qnet_kernel,
        out_shape=jax.ShapeDtypeStruct((padded_B, num_actions), jnp.bfloat16),
        grid=grid,
        in_specs=[
            pl.BlockSpec((tile_b, obs_dim), lambda i: (i, 0)),   # streamed x tiles
            pinned(w1b.shape), pinned(b1f.shape),
            pinned(w2b.shape), pinned(b2f.shape),
            pinned(w3b.shape), pinned(b3f.shape),
        ],
        out_specs=pl.BlockSpec((tile_b, num_actions), lambda i: (i, 0)),
        compiler_params=pltpu.CompilerParams(
            dimension_semantics=("parallel",)),   # shard batch tiles across TCs
    )(x, w1b, b1f, w2b, b2f, w3b, b3f)

    q = out if padded_B == B else out[:B]
    return q.astype(jnp.float32)   # caller-facing dtype matches the torch module


def init_params(key, obs_dim, num_actions, hidden=128):
    """Matches the PyTorch module's _init_weights: kaiming_uniform_ (defaults:
    a=0, fan_in, gain=sqrt(2) -> bound = sqrt(6/fan_in)) and zero biases.
    Weights stored as [in_features, out_features] (transposed from PyTorch)."""
    def kaiming_uniform(k, fan_in, fan_out):
        bound = jnp.sqrt(6.0 / fan_in)
        return jax.random.uniform(k, (fan_in, fan_out), jnp.float32, -bound, bound)

    k1, k2, k3 = jax.random.split(key, 3)
    return {
        "w1": kaiming_uniform(k1, obs_dim, hidden),
        "b1": jnp.zeros((1, hidden), jnp.float32),
        "w2": kaiming_uniform(k2, hidden, hidden),
        "b2": jnp.zeros((1, hidden), jnp.float32),
        "w3": kaiming_uniform(k3, hidden, num_actions),
        "b3": jnp.zeros((1, num_actions), jnp.float32),
    }


if __name__ == "__main__":
    key = jax.random.PRNGKey(0)
    k_param, k_state = jax.random.split(key)

    batch = 8
    obs_dim = 32
    num_actions = 8

    params = init_params(k_param, obs_dim, num_actions)
    state = jax.random.normal(k_state, (batch, obs_dim), jnp.float32)

    q_values = qnetwork_forward(state, params)
    jax.block_until_ready(q_values)
    assert q_values.shape == (batch, num_actions)
    assert q_values.dtype == jnp.float32

    # Pure-JAX reference with the same bf16 operand rounding, f32 accumulation,
    # and final bf16 store as the kernel.
    f32 = jnp.float32
    bf = lambda a: a.astype(jnp.bfloat16).astype(f32)
    h1 = jnp.maximum(bf(state) @ bf(params["w1"]) + params["b1"], 0.0)
    h2 = jnp.maximum(bf(h1) @ bf(params["w2"]) + params["b2"], 0.0)
    q_ref = (bf(h2) @ bf(params["w3"]) + params["b3"]).astype(jnp.bfloat16).astype(f32)

    max_err = float(jnp.max(jnp.abs(q_values - q_ref)))
    assert jnp.allclose(q_values, q_ref, atol=2e-2, rtol=2e-2), max_err

    print("KERNEL_OK")
</pallas_src>

<mosaic_0001>
module attributes {stable_mosaic.version = 11 : i64} {
  func.func @_qnet_kernel(%arg0: i32, %arg1: memref<16x32xf32, #tpu.memory_space<vmem>>, %arg2: memref<32x128xbf16, #tpu.memory_space<vmem>>, %arg3: memref<1x128xf32, #tpu.memory_space<vmem>>, %arg4: memref<128x128xbf16, #tpu.memory_space<vmem>>, %arg5: memref<1x128xf32, #tpu.memory_space<vmem>>, %arg6: memref<128x8xbf16, #tpu.memory_space<vmem>>, %arg7: memref<1x8xf32, #tpu.memory_space<vmem>>, %arg8: memref<16x8xbf16, #tpu.memory_space<vmem>>) attributes {dimension_semantics = [#tpu.dimension_semantics<parallel>], iteration_bounds = array<i64: 1>, scalar_prefetch = 0 : i64, scratch_operands = 0 : i64, tpu.core_type = #tpu.core_type<tc>, window_params = [{transform_indices = @transform_0, window_bounds = array<i64: 16, 32>}, {pipeline_mode = #tpu.pipeline_mode<synchronous>, transform_indices = @transform_1, window_bounds = array<i64: 32, 128>}, {pipeline_mode = #tpu.pipeline_mode<synchronous>, transform_indices = @transform_2, window_bounds = array<i64: 1, 128>}, {pipeline_mode = #tpu.pipeline_mode<synchronous>, transform_indices = @transform_3, window_bounds = array<i64: 128, 128>}, {pipeline_mode = #tpu.pipeline_mode<synchronous>, transform_indices = @transform_4, window_bounds = array<i64: 1, 128>}, {pipeline_mode = #tpu.pipeline_mode<synchronous>, transform_indices = @transform_5, window_bounds = array<i64: 128, 8>}, {pipeline_mode = #tpu.pipeline_mode<synchronous>, transform_indices = @transform_6, window_bounds = array<i64: 1, 8>}, {transform_indices = @transform_7, window_bounds = array<i64: 16, 8>}]} {
    %c0 = arith.constant 0 : index
    %c0_0 = arith.constant 0 : index
    %0 = vector.load %arg1[%c0, %c0_0] : memref<16x32xf32, #tpu.memory_space<vmem>>, vector<16x32xf32>
    %1 = arith.truncf %0 : vector<16x32xf32> to vector<16x32xbf16>
    %c0_1 = arith.constant 0 : index
    %c0_2 = arith.constant 0 : index
    %2 = vector.load %arg2[%c0_1, %c0_2] : memref<32x128xbf16, #tpu.memory_space<vmem>>, vector<32x128xbf16>
    %cst = arith.constant dense<0.000000e+00> : vector<16x128xf32>
    %3 = tpu.matmul %1, %2, %cst {dimension_numbers = #tpu.dot_dimension_numbers<[1], [0], [0], [1], [0, 0, 1, 1], [], []>} : vector<16x32xbf16>, vector<32x128xbf16>, vector<16x128xf32> -> vector<16x128xf32>
    %c0_3 = arith.constant 0 : index
    %c0_4 = arith.constant 0 : index
    %4 = vector.load %arg3[%c0_3, %c0_4] : memref<1x128xf32, #tpu.memory_space<vmem>>, vector<1x128xf32>
    %5 = vector.broadcast %4 : vector<1x128xf32> to vector<16x128xf32>
    %6 = arith.addf %3, %5 : vector<16x128xf32>
    %cst_5 = arith.constant 0.000000e+00 : f32
    %7 = vector.broadcast %cst_5 : f32 to vector<16x128xf32>
    %8 = arith.maximumf %6, %7 : vector<16x128xf32>
    %9 = arith.truncf %8 : vector<16x128xf32> to vector<16x128xbf16>
    %c0_6 = arith.constant 0 : index
    %c0_7 = arith.constant 0 : index
    %10 = vector.load %arg4[%c0_6, %c0_7] : memref<128x128xbf16, #tpu.memory_space<vmem>>, vector<128x128xbf16>
    %cst_8 = arith.constant dense<0.000000e+00> : vector<16x128xf32>
    %11 = tpu.matmul %9, %10, %cst_8 {dimension_numbers = #tpu.dot_dimension_numbers<[1], [0], [0], [1], [0, 0, 1, 1], [], []>} : vector<16x128xbf16>, vector<128x128xbf16>, vector<16x128xf32> -> vector<16x128xf32>
    %c0_9 = arith.constant 0 : index
    %c0_10 = arith.constant 0 : index
    %12 = vector.load %arg5[%c0_9, %c0_10] : memref<1x128xf32, #tpu.memory_space<vmem>>, vector<1x128xf32>
    %13 = vector.broadcast %12 : vector<1x128xf32> to vector<16x128xf32>
    %14 = arith.addf %11, %13 : vector<16x128xf32>
    %cst_11 = arith.constant 0.000000e+00 : f32
    %15 = vector.broadcast %cst_11 : f32 to vector<16x128xf32>
    %16 = arith.maximumf %14, %15 : vector<16x128xf32>
    %17 = arith.truncf %16 : vector<16x128xf32> to vector<16x128xbf16>
    %c0_12 = arith.constant 0 : index
    %c0_13 = arith.constant 0 : index
    %18 = vector.load %arg6[%c0_12, %c0_13] : memref<128x8xbf16, #tpu.memory_space<vmem>>, vector<128x8xbf16>
    %cst_14 = arith.constant dense<0.000000e+00> : vector<16x8xf32>
    %19 = tpu.matmul %17, %18, %cst_14 {dimension_numbers = #tpu.dot_dimension_numbers<[1], [0], [0], [1], [0, 0, 1, 1], [], []>} : vector<16x128xbf16>, vector<128x8xbf16>, vector<16x8xf32> -> vector<16x8xf32>
    %c0_15 = arith.constant 0 : index
    %c0_16 = arith.constant 0 : index
    %20 = vector.load %arg7[%c0_15, %c0_16] : memref<1x8xf32, #tpu.memory_space<vmem>>, vector<1x8xf32>
    %21 = vector.broadcast %20 : vector<1x8xf32> to vector<16x8xf32>
    %22 = arith.addf %19, %21 : vector<16x8xf32>
    %23 = arith.truncf %22 : vector<16x8xf32> to vector<16x8xbf16>
    %c0_17 = arith.constant 0 : index
    %c0_18 = arith.constant 0 : index
    %24 = vector.load %arg8[%c0_17, %c0_18] : memref<16x8xbf16, #tpu.memory_space<vmem>>, vector<16x8xbf16>
    tpu.vector_store %arg8[%c0_17, %c0_18], %23 {strides = array<i32>} : memref<16x8xbf16, #tpu.memory_space<vmem>>, vector<16x8xbf16>,
    return
  }
  func.func @transform_0(%arg0: i32) -> (i32, i32) {
    %c0_i32 = arith.constant 0 : i32
    %c0_i32_0 = arith.constant 0 : i32
    return %arg0, %c0_i32 : i32, i32
  }
  func.func @transform_1(%arg0: i32) -> (i32, i32) {
    %c0_i32 = arith.constant 0 : i32
    %c0_i32_0 = arith.constant 0 : i32
    %c0_i32_1 = arith.constant 0 : i32
    return %c0_i32, %c0_i32_0 : i32, i32
  }
  func.func @transform_2(%arg0: i32) -> (i32, i32) {
    %c0_i32 = arith.constant 0 : i32
    %c0_i32_0 = arith.constant 0 : i32
    %c0_i32_1 = arith.constant 0 : i32
    return %c0_i32, %c0_i32_0 : i32, i32
  }
  func.func @transform_3(%arg0: i32) -> (i32, i32) {
    %c0_i32 = arith.constant 0 : i32
    %c0_i32_0 = arith.constant 0 : i32
    %c0_i32_1 = arith.constant 0 : i32
    return %c0_i32, %c0_i32_0 : i32, i32
  }
  func.func @transform_4(%arg0: i32) -> (i32, i32) {
    %c0_i32 = arith.constant 0 : i32
    %c0_i32_0 = arith.constant 0 : i32
    %c0_i32_1 = arith.constant 0 : i32
    return %c0_i32, %c0_i32_0 : i32, i32
  }
  func.func @transform_5(%arg0: i32) -> (i32, i32) {
    %c0_i32 = arith.constant 0 : i32
    %c0_i32_0 = arith.constant 0 : i32
    %c0_i32_1 = arith.constant 0 : i32
    return %c0_i32, %c0_i32_0 : i32, i32
  }
  func.func @transform_6(%arg0: i32) -> (i32, i32) {
    %c0_i32 = arith.constant 0 : i32
    %c0_i32_0 = arith.constant 0 : i32
    %c0_i32_1 = arith.constant 0 : i32
    return %c0_i32, %c0_i32_0 : i32, i32
  }
  func.func @transform_7(%arg0: i32) -> (i32, i32) {
    %c0_i32 = arith.constant 0 : i32
    %c0_i32_0 = arith.constant 0 : i32
    return %arg0, %c0_i32 : i32, i32
  }
}

</mosaic_0001>

<llo_original>
// kernel: qnetwork_forward.1
$region0: #{qnetwork_forward.1}
  #allocation0 [shape = 'u32[]', space=smem, size = 0x4, offset = 0x4, fixed_abs, tag = 'smem constant byte address 0x4 - core index']
  #allocation1 [shape = 'u32[144,128]{1,0:T(1,128)}', space=vmem, size = 0x12000, scoped, tag = 'internal scratch']
  %s0 = inlined_call_operand.vmem [shape: f32[16,32], index: 0, kind: input, shape index: {}]
  %s1 = inlined_call_operand.vmem [shape: bf16[32,128], index: 1, kind: input, shape index: {}]
  %s2 = inlined_call_operand.vmem [shape: f32[1,128], index: 2, kind: input, shape index: {}]
  %s3 = inlined_call_operand.vmem [shape: bf16[128,128], index: 3, kind: input, shape index: {}]
  %s4 = inlined_call_operand.vmem [shape: f32[1,128], index: 4, kind: input, shape index: {}]
  %s5 = inlined_call_operand.vmem [shape: bf16[128,8], index: 5, kind: input, shape index: {}]
  %s6 = inlined_call_operand.vmem [shape: f32[1,8], index: 6, kind: input, shape index: {}]
  %s7 = inlined_call_operand.vmem [shape: bf16[16,8], index: 7, kind: output, shape index: {}]
  %s8 = sld [smem:[#allocation0]]
  $region38: #{qnetwork_forward.1} parent=0
    _
  %s10 = ssub.s32 1, %s8
  %s11 = scalar_select 0, %s10, %s8
  // Predicated region
  $region2: #{qnetwork_forward.1} parent=0 // pred_check
    _
  $region3: #{qnetwork_forward.1} parent=0 // pred_check_branch
    %13 = sbr.rel (0) target = $region5
  $region4: #{qnetwork_forward.1} parent=0 // pred_region
    _
  $region5: #{qnetwork_forward.1} parent=0 // pred_fallthru
    _
  // Predicated region
  $region6: #{qnetwork_forward.1} parent=0 // pred_check
    _
  $region7: #{qnetwork_forward.1} parent=0 // pred_check_branch
    %15 = sbr.rel (0) target = $region9
  $region8: #{qnetwork_forward.1} parent=0 // pred_region
    _
  $region9: #{qnetwork_forward.1} parent=0 // pred_fallthru
    _
  // Predicated region
  $region10: #{qnetwork_forward.1} parent=0 // pred_check
    _
  $region11: #{qnetwork_forward.1} parent=0 // pred_check_branch
    %17 = sbr.rel (0) target = $region13
  $region12: #{qnetwork_forward.1} parent=0 // pred_region
    _
  $region13: #{qnetwork_forward.1} parent=0 // pred_fallthru
    _
  // Predicated region
  $region14: #{qnetwork_forward.1} parent=0 // pred_check
    _
  $region15: #{qnetwork_forward.1} parent=0 // pred_check_branch
    %19 = sbr.rel (0) target = $region17
  $region16: #{qnetwork_forward.1} parent=0 // pred_region
    _
  $region17: #{qnetwork_forward.1} parent=0 // pred_fallthru
    _
  // Predicated region
  $region18: #{qnetwork_forward.1} parent=0 // pred_check
    _
  $region19: #{qnetwork_forward.1} parent=0 // pred_check_branch
    %21 = sbr.rel (0) target = $region21
  $region20: #{qnetwork_forward.1} parent=0 // pred_region
    _
  $region21: #{qnetwork_forward.1} parent=0 // pred_fallthru
    _
  // Predicated region
  $region22: #{qnetwork_forward.1} parent=0 // pred_check
    _
  $region23: #{qnetwork_forward.1} parent=0 // pred_check_branch
    %23 = sbr.rel (0) target = $region25
  $region24: #{qnetwork_forward.1} parent=0 // pred_region
    _
  $region25: #{qnetwork_forward.1} parent=0 // pred_fallthru
    _
  // Predicated region
  $region26: #{qnetwork_forward.1} parent=0 // pred_check
    _
  $region27: #{qnetwork_forward.1} parent=0 // pred_check_branch
    %25 = sbr.rel (0) target = $region29
  $region28: #{qnetwork_forward.1} parent=0 // pred_region
    _
  $region29: #{qnetwork_forward.1} parent=0 // pred_fallthru
    _
  %v27 = vld [vmem:[%s0] sm:$0xff]
  %v28 = vld [vmem:[%s0 + $0x8] sm:$0xff]
  %v29 = vpack.c.bf16 %v28, %v27
  %v30 = vld [vmem:[%s1] sm:$0xf]
  %v31 = vld [vmem:[%s1 + $0x4] sm:$0xf]
  %v32 = vld [vmem:[%s1 + $0x8] sm:$0xf]
  %v33 = vld [vmem:[%s1 + $0xc] sm:$0xf]
  %v34 = vld [vmem:[%s2] sm:$0x1]
  %v36 = vlaneseq
  %v37 = vshrl.u32 %v36, 7
  %v38 = vsub.s32 0, %v37
  %v39 = vrot.slane %v34, %v38
  %v45 = vunpack.c.l.b16 %v30
  %v46 = vunpack.c.l.b16 %v31
  %v47 = vunpack.c.l.b16 %v32
  %v48 = vunpack.c.l.b16 %v33
  %v49 = vpack.c.b16 %v46, %v45
  %v50 = vpack.c.b16 %v48, %v47
  %vm53 = vcmask 261120
  %v55 = vsel %vm53, %v29, 0
  %57 = vmatprep.subr.bf16.mxu0 0
  %58 = vmatpush1.bf16.msra.mxu0 0
  %59 = vmatprep.subr.bf16.mxu0 0
  %60 = vmatpush1.bf16.msra.mxu0 0
  %61 = vmatprep.subr.bf16.mxu0 0
  %62 = vmatpush1.bf16.msra.mxu0 0
  %63 = vmatprep.subr.bf16.mxu0 0
  %64 = vmatpush1.bf16.msra.mxu0 0
  %65 = vmatprep.subr.bf16.mxu0 0
  %66 = vmatpush1.bf16.msra.mxu0 0
  %67 = vmatprep.subr.bf16.mxu0 0
  %68 = vmatpush1.bf16.msra.mxu0 0
  %69 = vmatprep.subr.bf16.mxu0 0
  %70 = vmatpush1.bf16.msra.mxu0 %v50
  %71 = vmatprep.subr.bf16.mxu0 0
  %72 = vmatpush1.bf16.msra.mxu0 %v49
  %73 = vmatprep.subr.bf16.mxu0 0
  %74 = vmatpush2.bf16.msra.mxu0 0
  %75 = vmatprep.subr.bf16.mxu0 0
  %76 = vmatpush2.bf16.msra.mxu0 0
  %77 = vmatprep.subr.bf16.mxu0 0
  %78 = vmatpush2.bf16.msra.mxu0 0
  %79 = vmatprep.subr.bf16.mxu0 0
  %80 = vmatpush2.bf16.msra.mxu0 0
  %81 = vmatprep.subr.bf16.mxu0 0
  %82 = vmatpush2.bf16.msra.mxu0 0
  %83 = vmatprep.subr.bf16.mxu0 0
  %84 = vmatpush2.bf16.msra.mxu0 0
  %85 = vmatprep.subr.bf16.mxu0 0
  %86 = vmatpush2.bf16.msra.mxu0 0
  %87 = vmatprep.subr.bf16.mxu0 0
  %88 = vmatpush2.bf16.msra.mxu0 0
  %89 = vmatprep.mubr.bf16.mxu0 0
  %90 = vmatmul.mubr.bf16.gmra.mxu0 %v55
  %v91 = vpop.f32.mrf.mxu0
  %v92 = vadd.f32 %v39, %v91
  %v93 = vpop.f32.mrf.mxu0
  %v94 = vpop.f32.mrf.mxu0
  %v95 = vadd.f32 %v39, %v94
  %v96 = vpop.f32.mrf.mxu0
  %97 = vdwg.mxu0
  %v98 = vmax.f32 %v92, 0.0
  %v99 = vmax.f32 %v95, 0.0
  %v100 = vpack.c.bf16 %v99, %v98
  %v101 = vld [vmem:[%s3] sm:$0xf]
  %v102 = vld [vmem:[%s3 + $0x4] sm:$0xf]
  %v103 = vld [vmem:[%s3 + $0x8] sm:$0xf]
  %v104 = vld [vmem:[%s3 + $0xc] sm:$0xf]
  %v105 = vld [vmem:[%s3 + $0x10] sm:$0xf]
  %v106 = vld [vmem:[%s3 + $0x14] sm:$0xf]
  %v107 = vld [vmem:[%s3 + $0x18] sm:$0xf]
  %v108 = vld [vmem:[%s3 + $0x1c] sm:$0xf]
  %v109 = vld [vmem:[%s3 + $0x20] sm:$0xf]
  %v110 = vld [vmem:[%s3 + $0x24] sm:$0xf]
  %v111 = vld [vmem:[%s3 + $0x28] sm:$0xf]
  %v112 = vld [vmem:[%s3 + $0x2c] sm:$0xf]
  %v113 = vld [vmem:[%s3 + $0x30] sm:$0xf]
  %v114 = vld [vmem:[%s3 + $0x34] sm:$0xf]
  %v115 = vld [vmem:[%s3 + $0x38] sm:$0xf]
  %v116 = vld [vmem:[%s3 + $0x3c] sm:$0xf]
  %v117 = vld [vmem:[%s4] sm:$0x1]
  %v119 = vlaneseq
  %v120 = vshrl.u32 %v119, 7
  %v121 = vsub.s32 0, %v120
  %v122 = vrot.slane %v117, %v121
  %v140 = vunpack.c.l.b16 %v101
  %v141 = vunpack.c.l.b16 %v102
  %v142 = vunpack.c.l.b16 %v103
  %v143 = vunpack.c.l.b16 %v104
  %v144 = vunpack.c.l.b16 %v105
  %v145 = vunpack.c.l.b16 %v106
  %v146 = vunpack.c.l.b16 %v107
  %v147 = vunpack.c.l.b16 %v108
  %v148 = vunpack.c.l.b16 %v109
  %v149 = vunpack.c.l.b16 %v110
  %v150 = vunpack.c.l.b16 %v111
  %v151 = vunpack.c.l.b16 %v112
  %v152 = vunpack.c.l.b16 %v113
  %v153 = vunpack.c.l.b16 %v114
  %v154 = vunpack.c.l.b16 %v115
  %v155 = vunpack.c.l.b16 %v116
  %v156 = vpack.c.b16 %v141, %v140
  %v157 = vpack.c.b16 %v143, %v142
  %v158 = vpack.c.b16 %v145, %v144
  %v159 = vpack.c.b16 %v147, %v146
  %v160 = vpack.c.b16 %v149, %v148
  %v161 = vpack.c.b16 %v151, %v150
  %v162 = vpack.c.b16 %v153, %v152
  %v163 = vpack.c.b16 %v155, %v154
  %172 = vmatprep.subr.bf16.mxu0 0
  %173 = vmatpush1.bf16.msra.mxu0 %v163
  %174 = vmatprep.subr.bf16.mxu0 0
  %175 = vmatpush1.bf16.msra.mxu0 %v162
  %176 = vmatprep.subr.bf16.mxu0 0
  %177 = vmatpush1.bf16.msra.mxu0 %v161
  %178 = vmatprep.subr.bf16.mxu0 0
  %179 = vmatpush1.bf16.msra.mxu0 %v160
  %180 = vmatprep.subr.bf16.mxu0 0
  %181 = vmatpush1.bf16.msra.mxu0 %v159
  %182 = vmatprep.subr.bf16.mxu0 0
  %183 = vmatpush1.bf16.msra.mxu0 %v158
  %184 = vmatprep.subr.bf16.mxu0 0
  %185 = vmatpush1.bf16.msra.mxu0 %v157
  %186 = vmatprep.subr.bf16.mxu0 0
  %187 = vmatpush1.bf16.msra.mxu0 %v156
  %188 = vmatprep.subr.bf16.mxu0 0
  %189 = vmatpush2.bf16.msra.mxu0 0
  %190 = vmatprep.subr.bf16.mxu0 0
  %191 = vmatpush2.bf16.msra.mxu0 0
  %192 = vmatprep.subr.bf16.mxu0 0
  %193 = vmatpush2.bf16.msra.mxu0 0
  %194 = vmatprep.subr.bf16.mxu0 0
  %195 = vmatpush2.bf16.msra.mxu0 0
  %196 = vmatprep.subr.bf16.mxu0 0
  %197 = vmatpush2.bf16.msra.mxu0 0
  %198 = vmatprep.subr.bf16.mxu0 0
  %199 = vmatpush2.bf16.msra.mxu0 0
  %200 = vmatprep.subr.bf16.mxu0 0
  %201 = vmatpush2.bf16.msra.mxu0 0
  %202 = vmatprep.subr.bf16.mxu0 0
  %203 = vmatpush2.bf16.msra.mxu0 0
  %204 = vmatprep.mubr.bf16.mxu0 0
  %205 = vmatmul.mubr.bf16.gmra.mxu0 %v100
  %v206 = vpop.f32.mrf.mxu0
  %v207 = vadd.f32 %v122, %v206
  %v208 = vpop.f32.mrf.mxu0
  %v209 = vpop.f32.mrf.mxu0
  %v210 = vadd.f32 %v122, %v209
  %v211 = vpop.f32.mrf.mxu0
  %212 = vdwg.mxu0
  %v213 = vmax.f32 %v207, 0.0
  %v214 = vmax.f32 %v210, 0.0
  %v215 = vpack.c.bf16 %v214, %v213
  %v216 = vld [vmem:[%s5] sm:$0xf]
  %v217 = vld [vmem:[%s5 + $0x4] sm:$0xf]
  %v218 = vld [vmem:[%s5 + $0x8] sm:$0xf]
  %v219 = vld [vmem:[%s5 + $0xc] sm:$0xf]
  %v220 = vld [vmem:[%s5 + $0x10] sm:$0xf]
  %v221 = vld [vmem:[%s5 + $0x14] sm:$0xf]
  %v222 = vld [vmem:[%s5 + $0x18] sm:$0xf]
  %v223 = vld [vmem:[%s5 + $0x1c] sm:$0xf]
  %v224 = vld [vmem:[%s5 + $0x20] sm:$0xf]
  %v225 = vld [vmem:[%s5 + $0x24] sm:$0xf]
  %v226 = vld [vmem:[%s5 + $0x28] sm:$0xf]
  %v227 = vld [vmem:[%s5 + $0x2c] sm:$0xf]
  %v228 = vld [vmem:[%s5 + $0x30] sm:$0xf]
  %v229 = vld [vmem:[%s5 + $0x34] sm:$0xf]
  %v230 = vld [vmem:[%s5 + $0x38] sm:$0xf]
  %v231 = vld [vmem:[%s5 + $0x3c] sm:$0xf]
  %v232 = vld [vmem:[%s6] sm:$0x1]
  %v234 = vlaneseq
  %v235 = vshrl.u32 %v234, 7
  %v236 = vsub.s32 0, %v235
  %v237 = vrot.slane %v232, %v236
  %v255 = vunpack.c.l.b16 %v216
  %v256 = vunpack.c.l.b16 %v217
  %v257 = vunpack.c.l.b16 %v218
  %v258 = vunpack.c.l.b16 %v219
  %v259 = vunpack.c.l.b16 %v220
  %v260 = vunpack.c.l.b16 %v221
  %v261 = vunpack.c.l.b16 %v222
  %v262 = vunpack.c.l.b16 %v223
  %v263 = vunpack.c.l.b16 %v224
  %v264 = vunpack.c.l.b16 %v225
  %v265 = vunpack.c.l.b16 %v226
  %v266 = vunpack.c.l.b16 %v227
  %v267 = vunpack.c.l.b16 %v228
  %v268 = vunpack.c.l.b16 %v229
  %v269 = vunpack.c.l.b16 %v230
  %v270 = vunpack.c.l.b16 %v231
  %v271 = vpack.c.b16 %v256, %v255
  %v272 = vpack.c.b16 %v258, %v257
  %v273 = vpack.c.b16 %v260, %v259
  %v274 = vpack.c.b16 %v262, %v261
  %v275 = vpack.c.b16 %v264, %v263
  %v276 = vpack.c.b16 %v266, %v265
  %v277 = vpack.c.b16 %v268, %v267
  %v278 = vpack.c.b16 %v270, %v269
  %287 = vmatprep.subr.bf16.mxu0 0
  %288 = vmatpush1.bf16.msra.mxu0 %v278
  %289 = vmatprep.subr.bf16.mxu0 0
  %290 = vmatpush1.bf16.msra.mxu0 %v277
  %291 = vmatprep.subr.bf16.mxu0 0
  %292 = vmatpush1.bf16.msra.mxu0 %v276
  %293 = vmatprep.subr.bf16.mxu0 0
  %294 = vmatpush1.bf16.msra.mxu0 %v275
  %295 = vmatprep.subr.bf16.mxu0 0
  %296 = vmatpush1.bf16.msra.mxu0 %v274
  %297 = vmatprep.subr.bf16.mxu0 0
  %298 = vmatpush1.bf16.msra.mxu0 %v273
  %299 = vmatprep.subr.bf16.mxu0 0
  %300 = vmatpush1.bf16.msra.mxu0 %v272
  %301 = vmatprep.subr.bf16.mxu0 0
  %302 = vmatpush1.bf16.msra.mxu0 %v271
  %303 = vmatprep.subr.bf16.mxu0 0
  %304 = vmatpush2.bf16.msra.mxu0 0
  %305 = vmatprep.subr.bf16.mxu0 0
  %306 = vmatpush2.bf16.msra.mxu0 0
  %307 = vmatprep.subr.bf16.mxu0 0
  %308 = vmatpush2.bf16.msra.mxu0 0
  %309 = vmatprep.subr.bf16.mxu0 0
  %310 = vmatpush2.bf16.msra.mxu0 0
  %311 = vmatprep.subr.bf16.mxu0 0
  %312 = vmatpush2.bf16.msra.mxu0 0
  %313 = vmatprep.subr.bf16.mxu0 0
  %314 = vmatpush2.bf16.msra.mxu0 0
  %315 = vmatprep.subr.bf16.mxu0 0
  %316 = vmatpush2.bf16.msra.mxu0 0
  %317 = vmatprep.subr.bf16.mxu0 0
  %318 = vmatpush2.bf16.msra.mxu0 0
  %319 = vmatprep.mubr.bf16.mxu0 0
  %320 = vmatmul.mubr.bf16.gmra.mxu0 %v215
  %v321 = vpop.f32.mrf.mxu0
  %v322 = vadd.f32 %v237, %v321
  %v323 = vpop.f32.mrf.mxu0
  %v324 = vpop.f32.mrf.mxu0
  %v325 = vadd.f32 %v237, %v324
  %v326 = vpop.f32.mrf.mxu0
  %327 = vdwg.mxu0
  %v328 = vpack.c.bf16 %v325, %v322
  %v330 = vunpack.c.l.b16 %v328
  %v331 = vunpack.c.h.b16 %v328
  %v332 = vpack.c.b16 %v330, %v330
  %v333 = vpack.c.b16 %v331, %v331
  %vm336 = vcmask 60416
  %337 = vst.msk [vmem:[%s7] sm:$0xf] %vm336, %v332
  %338 = vst.msk [vmem:[%s7 + $0x4] sm:$0xf] %vm336, %v333
  // Predicated region
  $region30: #{qnetwork_forward.1} parent=0 // pred_check
    _
  $region31: #{qnetwork_forward.1} parent=0 // pred_check_branch
    %340 = sbr.rel (0) target = $region33
  $region32: #{qnetwork_forward.1} parent=0 // pred_region
    _
  $region33: #{qnetwork_forward.1} parent=0 // pred_fallthru
    _
  // Predicated region
  $region34: #{qnetwork_forward.1} parent=0 // pred_check
    _
  $region35: #{qnetwork_forward.1} parent=0 // pred_check_branch
    %342 = sbr.rel (0) target = $region37
  $region36: #{qnetwork_forward.1} parent=0 // pred_region
    _
  $region37: #{qnetwork_forward.1} parent=0 // pred_fallthru
    _

</llo_original>
